<compile_context>
chip_gen: v6e
topology: v6e:2x2x1
jax: 0.10.0
libtpu: 0.0.40
codegen_flags: <defaults>
</compile_context>

<pallas_src>
import math
import functools

import jax
import jax.numpy as jnp
from jax.experimental import pallas as pl
from jax.experimental.pallas import tpu as pltpu


# ---------------------------------------------------------------------------
# Tuning constants
# ---------------------------------------------------------------------------
# Double-buffered working-set budget per grid step (x + pe + out, x2 buffers).
# Kept well under v7x's 64 MiB physical VMEM; v5e/v6e have 128 MiB so this is
# conservative there too.
_TILE_BUDGET_BYTES = 24 * 1024 * 1024
# Scoped VMEM limit: above the tile budget, below v7x physical (64 MiB).
_VMEM_LIMIT_BYTES = 40 * 1024 * 1024


# ---------------------------------------------------------------------------
# Parameter / buffer setup (plain JAX glue — mirrors nn.Module.__init__)
# ---------------------------------------------------------------------------
def make_positional_encoding(d_model: int, max_len: int) -> jnp.ndarray:
    """Builds the (max_len, 1, d_model) sinusoidal positional-encoding buffer."""
    position = jnp.arange(max_len, dtype=jnp.float32)[:, None]          # (L, 1)
    div_term = jnp.exp(
        jnp.arange(0, d_model, 2, dtype=jnp.float32)
        * (-math.log(10000.0) / d_model)
    )                                                                    # (D/2,)
    angles = position * div_term                                         # (L, D/2)
    # pe[:, 0::2] = sin, pe[:, 1::2] = cos  -> interleave along last dim
    pe = jnp.stack([jnp.sin(angles), jnp.cos(angles)], axis=-1)          # (L, D/2, 2)
    pe = pe.reshape(max_len, d_model)                                    # (L, D)
    return pe[:, None, :]                                                # (L, 1, D)


# ---------------------------------------------------------------------------
# In-kernel helpers (plain jnp ops only -> safe for Mosaic and interpret mode)
# ---------------------------------------------------------------------------
def _mix32(x):
    """lowbias32 integer finalizer — good avalanche for counter inputs."""
    x = x ^ (x >> 16)
    x = x * jnp.uint32(0x7FEB352D)
    x = x ^ (x >> 15)
    x = x * jnp.uint32(0x846CA68B)
    x = x ^ (x >> 16)
    return x


def _flat_index_u32(shape):
    """Row-major flat element index over `shape` as uint32 (>=2D shapes only)."""
    strides = pl.strides_from_shape(shape)
    idx = jax.lax.broadcasted_iota(jnp.int32, shape, 0) * strides[0]
    for axis in range(1, len(shape)):
        idx = idx + jax.lax.broadcasted_iota(jnp.int32, shape, axis) * strides[axis]
    return idx.astype(jnp.uint32)


# ---------------------------------------------------------------------------
# Pallas kernels (rank-agnostic: work for 2D and 3D tiles via broadcasting)
# ---------------------------------------------------------------------------
def _pe_add_kernel(x_ref, pe_ref, o_ref):
    o_ref[...] = (x_ref[...] + pe_ref[...]).astype(o_ref.dtype)


def _pe_add_dropout_kernel(seed_ref, x_ref, pe_ref, o_ref, *, p: float, tile_elems: int):
    # Fused add + dropout (training mode): keep w.p. (1-p), scale by 1/(1-p).
    y = x_ref[...] + pe_ref[...]

    # Stateless counter-based RNG: unique uint32 counter per output element
    # (tile-local flat index + per-grid-step offset), mixed with the seed.
    base = (pl.program_id(0) * tile_elems).astype(jnp.uint32)
    ctr = _flat_index_u32(y.shape) + base
    seed = seed_ref[0].astype(jnp.uint32)
    bits = _mix32(ctr ^ _mix32(seed + jnp.uint32(0x9E3779B9)))

    threshold = jnp.uint32(min(int(p * 4294967296.0), 4294967295))
    keep = (bits >= threshold).astype(y.dtype)
    scale = jnp.asarray(1.0 / (1.0 - p), dtype=y.dtype)
    # Single multiply (mask folded with scale) instead of select.
    o_ref[...] = (y * (keep * scale)).astype(o_ref.dtype)


# ---------------------------------------------------------------------------
# Tile sizing
# ---------------------------------------------------------------------------
def _pick_tile_rows(S: int, bytes_per_row: int, budget: int = _TILE_BUDGET_BYTES) -> int:
    """Largest row-tile whose double-buffered footprint stays under `budget`."""
    ts = max(1, budget // max(1, bytes_per_row))
    ts = min(ts, S)
    if ts < S:
        # keep the second-to-last block dim sublane-aligned (multiple of 8)
        ts = max(8, (ts // 8) * 8)
        ts = min(ts, S)
    return int(ts)


# ---------------------------------------------------------------------------
# Wrapper
# ---------------------------------------------------------------------------
@functools.partial(jax.jit, static_argnames=("p", "training"))
def positional_encoding_forward(x, pe, seed, *, p: float = 0.1, training: bool = False):
    """x: (S, B, D); pe: (max_len, 1, D); seed: int32 scalar array."""
    S, B, D = x.shape
    use_dropout = training and p > 0.0
    if use_dropout and p >= 1.0:
        # PyTorch Dropout(p=1) zeroes everything in training mode.
        return jnp.zeros_like(x)

    x_item = x.dtype.itemsize
    pe_item = pe.dtype.itemsize

    if D % 128 == 0:
        # D already lane-aligned: natural (TS, B, D) blocks, pe kept in its
        # (TS, 1, D) form and broadcast over batch inside the kernel.
        xk = x
        pek = pe[:S]                                         # (S, 1, D)
        row_bytes = 2 * (2 * B * D * x_item + D * pe_item)   # double-buffered
        ts = _pick_tile_rows(S, row_bytes)
        x_spec = pl.BlockSpec((ts, B, D), lambda i, *_: (i, 0, 0))
        pe_spec = pl.BlockSpec((ts, 1, D), lambda i, *_: (i, 0, 0))
        o_spec = pl.BlockSpec((ts, B, D), lambda i, *_: (i, 0, 0))
        out_shape = jax.ShapeDtypeStruct((S, B, D), x.dtype)
        tile_elems = ts * B * D
        reshape_back = lambda o: o
    else:
        # Lane-dense path: fold batch into lanes so stores are as wide as
        # possible (B*D lanes instead of D).  pe is pre-expanded across batch
        # in the wrapper — cheap exactly when D is small (which is when this
        # path triggers); in a real model pek would be cached across calls.
        W = B * D
        xk = x.reshape(S, W)
        pek = jnp.tile(pe[:S, 0, :], (1, B))                 # (S, W)
        row_bytes = 2 * (2 * W * x_item + W * pe_item)       # double-buffered
        ts = _pick_tile_rows(S, row_bytes)
        x_spec = pl.BlockSpec((ts, W), lambda i, *_: (i, 0))
        pe_spec = pl.BlockSpec((ts, W), lambda i, *_: (i, 0))
        o_spec = pl.BlockSpec((ts, W), lambda i, *_: (i, 0))
        out_shape = jax.ShapeDtypeStruct((S, W), x.dtype)
        tile_elems = ts * W
        reshape_back = lambda o: o.reshape(S, B, D)

    grid = (pl.cdiv(S, ts),)
    cparams = pltpu.CompilerParams(
        dimension_semantics=("parallel",),          # each grid step is independent
        vmem_limit_bytes=_VMEM_LIMIT_BYTES,
    )

    if use_dropout:
        grid_spec = pltpu.PrefetchScalarGridSpec(
            num_scalar_prefetch=1,
            grid=grid,
            in_specs=[x_spec, pe_spec],
            out_specs=o_spec,
        )
        out = pl.pallas_call(
            functools.partial(_pe_add_dropout_kernel, p=p, tile_elems=tile_elems),
            out_shape=out_shape,
            grid_spec=grid_spec,
            compiler_params=cparams,
        )(jnp.asarray([seed], dtype=jnp.int32), xk, pek)
    else:
        grid_spec = pltpu.PrefetchScalarGridSpec(
            num_scalar_prefetch=0,
            grid=grid,
            in_specs=[x_spec, pe_spec],
            out_specs=o_spec,
        )
        out = pl.pallas_call(
            _pe_add_kernel,
            out_shape=out_shape,
            grid_spec=grid_spec,
            compiler_params=cparams,
        )(xk, pek)

    return reshape_back(out)


# ---------------------------------------------------------------------------
# Test
# ---------------------------------------------------------------------------
if __name__ == "__main__":
    S, B, D = 8, 2, 32          # seq, batch, d_model
    MAX_LEN = 64

    key = jax.random.PRNGKey(0)
    x = jax.random.normal(key, (S, B, D), dtype=jnp.float32)
    pe = make_positional_encoding(D, MAX_LEN)
    seed = jnp.int32(0)

    ref = x + pe[:S]            # broadcast (S,1,D) over batch

    # Eval mode (dropout = identity): exact reference check.
    out_eval = jax.block_until_ready(
        positional_encoding_forward(x, pe, seed, p=0.1, training=False))
    assert out_eval.shape == (S, B, D)
    assert jnp.allclose(out_eval, ref, atol=1e-6), "eval-mode mismatch"

    # Training mode: every element must be either 0 (dropped) or (x+pe)/(1-p).
    p = 0.1
    out_train = jax.block_until_ready(
        positional_encoding_forward(x, pe, seed, p=p, training=True))
    assert out_train.shape == (S, B, D)
    scaled_ref = ref / (1.0 - p)
    ok = jnp.isclose(out_train, scaled_ref, rtol=1e-5, atol=1e-5) | (out_train == 0.0)
    assert bool(ok.all()), "training-mode values must be 0 or (x+pe)/(1-p)"
    keep_frac = float(jnp.mean((out_train != 0.0).astype(jnp.float32)))
    assert 0.5 < keep_frac <= 1.0, f"suspicious dropout keep fraction: {keep_frac}"

    print("KERNEL_OK")
</pallas_src>

<mosaic_0001>
module attributes {stable_mosaic.version = 11 : i64} {
  func.func @_pe_add_kernel(%arg0: i32, %arg1: memref<8x64xf32, #tpu.memory_space<vmem>>, %arg2: memref<8x64xf32, #tpu.memory_space<vmem>>, %arg3: memref<8x64xf32, #tpu.memory_space<vmem>>) attributes {dimension_semantics = [#tpu.dimension_semantics<parallel>], iteration_bounds = array<i64: 1>, scalar_prefetch = 0 : i64, scratch_operands = 0 : i64, tpu.core_type = #tpu.core_type<tc>, window_params = [{transform_indices = @transform_0, window_bounds = array<i64: 8, 64>}, {transform_indices = @transform_1, window_bounds = array<i64: 8, 64>}, {transform_indices = @transform_2, window_bounds = array<i64: 8, 64>}]} {
    %c0 = arith.constant 0 : index
    %c0_0 = arith.constant 0 : index
    %0 = vector.load %arg1[%c0, %c0_0] : memref<8x64xf32, #tpu.memory_space<vmem>>, vector<8x64xf32>
    %c0_1 = arith.constant 0 : index
    %c0_2 = arith.constant 0 : index
    %1 = vector.load %arg2[%c0_1, %c0_2] : memref<8x64xf32, #tpu.memory_space<vmem>>, vector<8x64xf32>
    %2 = arith.addf %0, %1 : vector<8x64xf32>
    %c0_3 = arith.constant 0 : index
    %c0_4 = arith.constant 0 : index
    %3 = vector.load %arg3[%c0_3, %c0_4] : memref<8x64xf32, #tpu.memory_space<vmem>>, vector<8x64xf32>
    tpu.vector_store %arg3[%c0_3, %c0_4], %2 {strides = array<i32>} : memref<8x64xf32, #tpu.memory_space<vmem>>, vector<8x64xf32>,
    return
  }
  func.func @transform_0(%arg0: i32) -> (i32, i32) {
    %c0_i32 = arith.constant 0 : i32
    %c0_i32_0 = arith.constant 0 : i32
    return %arg0, %c0_i32 : i32, i32
  }
  func.func @transform_1(%arg0: i32) -> (i32, i32) {
    %c0_i32 = arith.constant 0 : i32
    %c0_i32_0 = arith.constant 0 : i32
    return %arg0, %c0_i32 : i32, i32
  }
  func.func @transform_2(%arg0: i32) -> (i32, i32) {
    %c0_i32 = arith.constant 0 : i32
    %c0_i32_0 = arith.constant 0 : i32
    return %arg0, %c0_i32 : i32, i32
  }
}

</mosaic_0001>

<llo_original>
// kernel: tile.7
$region0: #{tile.7}
  %s0 = inlined_call_operand.vmem [shape: f32[8,2,32], index: 0, kind: input, shape index: {}]
  %s1 = inlined_call_operand.vmem [shape: f32[8,64], index: 1, kind: output, shape index: {}]
  $region1: #{tile.7} parent=0
    #allocation0 [shape = 'u8[32768]{0}', space=vmem, size = 0x8000, scoped, tag = 'scoped mem for input reshape']
    %s3 = sshll.u32 1, 2
    %s4 = ssub.s32 %s3, 1
    %s5 = smul.addr 2, 7
    %s6 = scalar_lea.vmem %s0, %s5
    %v7 = vld [vmem:[%s6] sm:%s4]
    %s8 = scalar_lea.vmem [#allocation0], 56
    %9 = vst [vmem:[%s8] sm:%s4] %v7
    %s10 = smul.addr 2, 6
    %s11 = scalar_lea.vmem %s0, %s10
    %v12 = vld [vmem:[%s11] sm:%s4]
    %s13 = scalar_lea.vmem [#allocation0], 48
    %14 = vst [vmem:[%s13] sm:%s4] %v12
    %s15 = smul.addr 2, 5
    %s16 = scalar_lea.vmem %s0, %s15
    %v17 = vld [vmem:[%s16] sm:%s4]
    %s18 = scalar_lea.vmem [#allocation0], 40
    %19 = vst [vmem:[%s18] sm:%s4] %v17
    %s20 = smul.addr 2, 4
    %s21 = scalar_lea.vmem %s0, %s20
    %v22 = vld [vmem:[%s21] sm:%s4]
    %s23 = scalar_lea.vmem [#allocation0], 32
    %24 = vst [vmem:[%s23] sm:%s4] %v22
    %s25 = smul.addr 2, 3
    %s26 = scalar_lea.vmem %s0, %s25
    %v27 = vld [vmem:[%s26] sm:%s4]
    %s28 = scalar_lea.vmem [#allocation0], 24
    %29 = vst [vmem:[%s28] sm:%s4] %v27
    %s30 = smul.addr 2, 2
    %s31 = scalar_lea.vmem %s0, %s30
    %v32 = vld [vmem:[%s31] sm:%s4]
    %s33 = scalar_lea.vmem [#allocation0], 16
    %34 = vst [vmem:[%s33] sm:%s4] %v32
    %s35 = scalar_lea.vmem %s0, 2
    %v36 = vld [vmem:[%s35] sm:%s4]
    %s37 = scalar_lea.vmem [#allocation0], 8
    %38 = vst [vmem:[%s37] sm:%s4] %v36
    %v39 = vld [vmem:[%s0] sm:%s4]
    %40 = vst [vmem:[#allocation0] sm:%s4] %v39
    %v41 = vld [vmem:[#allocation0] ss:$8 sm:$0xf]
    %v42 = vld [vmem:[#allocation0] ss:$8 sm:$0xf0]
    %vm43 = vcmask 1047556
    %v44 = vsel %vm43, %v42, %v41
    %vm45 = vcmask 261120
    %46 = vst.msk [vmem:[%s1] sm:$0xff] %vm45, %v44
    %s47 = scalar_lea.vmem [#allocation0], 1
    %v48 = vld [vmem:[%s47] ss:$8 sm:$0xf]
    %s49 = scalar_lea.vmem [#allocation0], 1
    %v50 = vld [vmem:[%s49] ss:$8 sm:$0xf0]
    %vm51 = vcmask 1047556
    %v52 = vsel %vm51, %v50, %v48
    %53 = vrot.lane.b32.xlu0 %v52, 32
    %v54 = vpop.permute.xlu0 %53
    %vm55 = vcmask 523520
    %56 = vst.msk [vmem:[%s1] sm:$0xff] %vm55, %v54

// kernel: positional_encoding_forward.1
$region0: #{positional_encoding_forward.1}
  #allocation0 [shape = 'u32[]', space=smem, size = 0x4, offset = 0x4, fixed_abs, tag = 'smem constant byte address 0x4 - core index']
  #allocation1 [shape = 'u32[144,128]{1,0:T(1,128)}', space=vmem, size = 0x12000, scoped, tag = 'internal scratch']
  %s0 = inlined_call_operand.vmem [shape: f32[8,64], index: 0, kind: input, shape index: {}]
  %s1 = inlined_call_operand.vmem [shape: f32[8,64], index: 1, kind: input, shape index: {}]
  %s2 = inlined_call_operand.vmem [shape: f32[8,64], index: 2, kind: output, shape index: {}]
  %s3 = sld [smem:[#allocation0]]
  $region18: #{positional_encoding_forward.1} parent=0
    _
  %s5 = ssub.s32 1, %s3
  %s6 = scalar_select 0, %s5, %s3
  // Predicated region
  $region2: #{positional_encoding_forward.1} parent=0 // pred_check
    _
  $region3: #{positional_encoding_forward.1} parent=0 // pred_check_branch
    %8 = sbr.rel (0) target = $region5
  $region4: #{positional_encoding_forward.1} parent=0 // pred_region
    _
  $region5: #{positional_encoding_forward.1} parent=0 // pred_fallthru
    _
  // Predicated region
  $region6: #{positional_encoding_forward.1} parent=0 // pred_check
    _
  $region7: #{positional_encoding_forward.1} parent=0 // pred_check_branch
    %10 = sbr.rel (0) target = $region9
  $region8: #{positional_encoding_forward.1} parent=0 // pred_region
    _
  $region9: #{positional_encoding_forward.1} parent=0 // pred_fallthru
    _
  %v11 = vld [vmem:[%s0] sm:$0xff]
  %v12 = vld [vmem:[%s1] sm:$0xff]
  %v13 = vadd.f32 %v11, %v12
  %vm14 = vcmask 523264
  %15 = vst.msk [vmem:[%s2] sm:$0xff] %vm14, %v13
  // Predicated region
  $region10: #{positional_encoding_forward.1} parent=0 // pred_check
    _
  $region11: #{positional_encoding_forward.1} parent=0 // pred_check_branch
    %17 = sbr.rel (0) target = $region13
  $region12: #{positional_encoding_forward.1} parent=0 // pred_region
    _
  $region13: #{positional_encoding_forward.1} parent=0 // pred_fallthru
    _
  // Predicated region
  $region14: #{positional_encoding_forward.1} parent=0 // pred_check
    _
  $region15: #{positional_encoding_forward.1} parent=0 // pred_check_branch
    %19 = sbr.rel (0) target = $region17
  $region16: #{positional_encoding_forward.1} parent=0 // pred_region
    _
  $region17: #{positional_encoding_forward.1} parent=0 // pred_fallthru
    _

</llo_original>
